<compile_context>
chip_gen: v7x
topology: tpu7x:2x2x1
jax: 0.10.0
libtpu: 0.0.40
codegen_flags: <defaults>
</compile_context>

<pallas_src>
import math
import numpy as np
import jax
import jax.numpy as jnp
from jax import lax
from jax.experimental import pallas as pl
from jax.experimental.pallas import tpu as pltpu


def _round_up(x, m):
    return ((x + m - 1) // m) * m


def _cdiv(a, b):
    return (a + b - 1) // b


def _pad2(a, rows, cols):
    r, c = a.shape
    if r == rows and c == cols:
        return a
    return jnp.pad(a, ((0, rows - r), (0, cols - c)))


def _make_denoise_kernel(n_in, n_out, norm, hw_dropout, drop_threshold):
    """Build a kernel closed over static layer counts / flags."""

    def kernel(seed_ref, *refs):
        it = iter(refs)
        x_ref = next(it)          # (TB, in_dim0)               f32
        t_ref = next(it)          # (TB, 1)                     f32
        f_ref = next(it)          # (1, half)                   f32
        w_emb_cos = next(it)      # (half, E_pad)               f32
        w_emb_sin = next(it)      # (half, E_pad)               f32
        b_emb = next(it)          # (1, E_pad)                  f32
        w1_x = next(it)           # (in_dim0, d1_pad)           bf16
        w1_e = next(it)           # (E_pad, d1_pad)             bf16
        b1 = next(it)             # (1, d1_pad)                 f32
        rest_in = [(next(it), next(it)) for _ in range(n_in - 1)]
        outs = [(next(it), next(it)) for _ in range(n_out)]
        o_ref = next(it)          # (TB, out_pad)               f32

        bf16 = jnp.bfloat16

        # --- sinusoidal time embedding via split matmuls (no lane concat) ----
        temp = t_ref[...] * f_ref[...]                       # (TB, half)
        emb = (jnp.dot(jnp.cos(temp), w_emb_cos[...],
                       preferred_element_type=jnp.float32)
               + jnp.dot(jnp.sin(temp), w_emb_sin[...],
                         preferred_element_type=jnp.float32)
               + b_emb[...])

        # --- input features: normalize then dropout (matches torch order) ----
        x = x_ref[...]
        if norm:
            sumsq = jnp.sum(x * x, axis=-1, keepdims=True)
            # == x / max(||x||, 1e-12); rsqrt goes to the (idle) EUP slot.
            x = x * lax.rsqrt(jnp.maximum(sumsq, 1e-24))
        if hw_dropout:
            # 1/(1-p) scale is pre-folded into w1_x host-side; only mask here.
            pltpu.prng_seed(seed_ref[0]
                            ^ (pl.program_id(0) * jnp.int32(1640531527)))
            raw = pltpu.prng_random_bits(x.shape)
            if raw.dtype != jnp.int32:
                raw = pltpu.bitcast(raw, jnp.int32)
            r = jnp.bitwise_and(raw, jnp.int32(0x7FFFFFFF))  # uniform [0, 2^31)
            x = jnp.where(r >= jnp.int32(drop_threshold), x, 0.0)

        # --- first in-layer: split x / emb contributions (no lane concat) ----
        # bf16 operands -> MXU native rate; f32 accumulation; biases/tanh in f32.
        h = (jnp.dot(x.astype(bf16), w1_x[...],
                     preferred_element_type=jnp.float32)
             + jnp.dot(emb.astype(bf16), w1_e[...],
                       preferred_element_type=jnp.float32)
             + b1[...])
        h = jnp.tanh(h)

        # --- remaining MLP stacks (weights already (d_in, d_out), bf16) -------
        # TODO(synk): if profiling shows EUP-bound (tanh) on v6e/v7x for small
        # hidden dims, swap to a VPU rational-tanh approximation here.
        for (w_ref, b_ref) in rest_in:
            h = jnp.tanh(jnp.dot(h.astype(bf16), w_ref[...],
                                 preferred_element_type=jnp.float32)
                         + b_ref[...])
        for i, (w_ref, b_ref) in enumerate(outs):
            h = (jnp.dot(h.astype(bf16), w_ref[...],
                         preferred_element_type=jnp.float32)
                 + b_ref[...])
            if i != n_out - 1:
                h = jnp.tanh(h)

        o_ref[...] = h.astype(o_ref.dtype)

    return kernel


def denoise_forward(x, timesteps, params, *, emb_size, norm=False,
                    mess_dropout=True, dropout_p=0.5, seed=0,
                    batch_tile=512):
    """Pallas-backed equivalent of Denoise.forward."""
    B, in_dim0 = x.shape
    half = emb_size // 2
    E = emb_size
    E_pad = _round_up(E, 128)
    n_in = len(params["in"])
    n_out = len(params["out"])
    assert n_in >= 1 and n_out >= 1, "Denoise requires >=1 in/out layer"

    out_dim = int(params["out"][-1][0].shape[0])

    # --- batch tiling: no host-side pad, ragged last block handled by Pallas --
    TB = min(_round_up(max(batch_tile, 8), 8),
             max(_round_up(_cdiv(max(B, 1), 4), 8), 8),  # keep >=4 tiles (megacore)
             _round_up(max(B, 1), 8))
    num_tiles = _cdiv(B, TB)

    x32 = jnp.asarray(x, jnp.float32)
    t32 = jnp.asarray(timesteps, jnp.float32).reshape(B, 1)

    # --- dropout constants / backend-dependent path ---------------------------
    if mess_dropout:
        keep_scale = (1.0 / (1.0 - dropout_p)) if dropout_p < 1.0 else 0.0
    else:
        keep_scale = 1.0
    drop_threshold = min(int(round(dropout_p * (1 << 31))), (1 << 31) - 1)
    use_hw_prng = bool(mess_dropout) and jax.default_backend() == "tpu"
    if mess_dropout and not use_hw_prng:
        # TODO(synk): hardware PRNG has no lowering off-TPU (interpret/CPU);
        # fall back to a host-side mask.  keep_scale is folded into W1_x below.
        keep = jax.random.bernoulli(jax.random.PRNGKey(seed),
                                    1.0 - dropout_p, x32.shape)
        x32 = jnp.where(keep, x32, 0.0)

    # --- host-side weight repacking: pre-transposed, concat-free, lane-dense --
    bf16 = jnp.bfloat16
    freqs = jnp.exp(-math.log(10000.0)
                    * jnp.arange(half, dtype=jnp.float32) / half).reshape(1, half)

    w_emb, b_emb = params["emb"]
    w_emb_t = jnp.asarray(w_emb, jnp.float32).T               # (E, E)
    w_emb_cos = _pad2(w_emb_t[:half], half, E_pad)            # rows hit by cos
    w_emb_sin = _pad2(w_emb_t[half:2 * half], half, E_pad)    # rows hit by sin
    # (odd emb_size: last row multiplies the zero pad column -> dropped)
    b_emb_p = _pad2(jnp.asarray(b_emb, jnp.float32).reshape(1, -1), 1, E_pad)

    w1, b1 = params["in"][0]
    d1 = int(w1.shape[0])
    d1_pad = _round_up(d1, 128)
    w1_t = jnp.asarray(w1, jnp.float32).T                     # (in_dim0+E, d1)
    w1_x = _pad2(w1_t[:in_dim0] * jnp.float32(keep_scale),
                 in_dim0, d1_pad).astype(bf16)
    w1_e = _pad2(w1_t[in_dim0:], E_pad, d1_pad).astype(bf16)
    b1_p = _pad2(jnp.asarray(b1, jnp.float32).reshape(1, -1), 1, d1_pad)

    inputs = [x32, t32, freqs, w_emb_cos, w_emb_sin, b_emb_p, w1_x, w1_e, b1_p]
    matmul_kn = [(half, E_pad), (half, E_pad),
                 (in_dim0, d1_pad), (E_pad, d1_pad)]
    tanh_widths = [d1_pad]

    prev_pad = d1_pad
    for (w, b) in params["in"][1:]:
        d_out = int(w.shape[0])
        d_pad = _round_up(d_out, 128)
        inputs += [_pad2(jnp.asarray(w, jnp.float32).T, prev_pad, d_pad).astype(bf16),
                   _pad2(jnp.asarray(b, jnp.float32).reshape(1, -1), 1, d_pad)]
        matmul_kn.append((prev_pad, d_pad))
        tanh_widths.append(d_pad)
        prev_pad = d_pad
    for li, (w, b) in enumerate(params["out"]):
        d_out = int(w.shape[0])
        d_pad = _round_up(d_out, 128)
        inputs += [_pad2(jnp.asarray(w, jnp.float32).T, prev_pad, d_pad).astype(bf16),
                   _pad2(jnp.asarray(b, jnp.float32).reshape(1, -1), 1, d_pad)]
        matmul_kn.append((prev_pad, d_pad))
        if li != n_out - 1:
            tanh_widths.append(d_pad)
        prev_pad = d_pad
    out_pad = prev_pad

    kernel = _make_denoise_kernel(n_in, n_out, norm, use_hw_prng, drop_threshold)

    # --- BlockSpecs -----------------------------------------------------------
    def tiled_spec(a):         # batch-tiled arrays (x, t)
        w = int(a.shape[1])
        return pl.BlockSpec((TB, w), lambda i, s: (i, 0))

    def resident_spec(a):      # weights / biases / freqs: VMEM-resident
        # TODO(synk): pipeline_mode=pl.Buffered(1) would drop the redundant 2nd
        # buffer for these constant-index weights; default kept for portability.
        return pl.BlockSpec(tuple(int(d) for d in a.shape), lambda i, s: (0, 0))

    in_specs = [tiled_spec(x32), tiled_spec(t32)]
    in_specs += [resident_spec(a) for a in inputs[2:]]

    # --- cost estimate + VMEM budget ------------------------------------------
    flops = 2 * B * sum(k * n for k, n in matmul_kn)
    transc = B * (2 * half + sum(tanh_widths) + (1 if norm else 0))
    resident_bytes = sum(int(np.prod(a.shape)) * a.dtype.itemsize
                         for a in inputs[2:])
    moving_bytes = (int(x32.size) + int(t32.size) + B * out_pad) * 4
    ce = pl.CostEstimate(flops=int(flops), transcendentals=int(transc),
                         bytes_accessed=int(moving_bytes + resident_bytes))

    tile_bytes = (TB * in_dim0 + TB + TB * out_pad) * 4
    needed = 2 * tile_bytes + 2 * resident_bytes + (8 << 20)
    try:
        vmem_cap = int(pltpu.get_tpu_info().vmem_capacity_bytes)
    except Exception:
        vmem_cap = 64 << 20            # conservative (v7x per-TC)
    vmem_limit = int(min(max(needed, 32 << 20), vmem_cap))

    seed_arr = jnp.array([seed], dtype=jnp.int32)

    fn = pl.pallas_call(
        kernel,
        out_shape=jax.ShapeDtypeStruct((B, out_pad), jnp.float32),
        grid_spec=pltpu.PrefetchScalarGridSpec(
            num_scalar_prefetch=1,
            grid=(num_tiles,),
            in_specs=in_specs,
            out_specs=pl.BlockSpec((TB, out_pad), lambda i, s: (i, 0)),
        ),
        compiler_params=pltpu.CompilerParams(
            dimension_semantics=("parallel",),
            vmem_limit_bytes=vmem_limit),
        cost_estimate=ce,
    )
    out = fn(seed_arr, *inputs)
    return out[:, :out_dim]


def init_denoise_params(key, in_dims, out_dims, emb_size):
    """Deterministic init matching Denoise.init_weights (Xavier-ish normal)."""
    in_dims_temp = [in_dims[0] + emb_size] + list(in_dims[1:])
    out_dims_temp = list(out_dims)

    def linear(k, d_in, d_out):
        kw, kb = jax.random.split(k)
        std = np.sqrt(2.0 / (d_out + d_in))              # weight.size() = (out, in)
        w = std * jax.random.normal(kw, (d_out, d_in), dtype=jnp.float32)
        b = 0.001 * jax.random.normal(kb, (d_out,), dtype=jnp.float32)
        return w, b

    n_keys = 1 + (len(in_dims_temp) - 1) + (len(out_dims_temp) - 1)
    keys = jax.random.split(key, n_keys)
    ki = iter(keys)
    params = {
        "emb": linear(next(ki), emb_size, emb_size),
        "in": [linear(next(ki), d_in, d_out)
               for d_in, d_out in zip(in_dims_temp[:-1], in_dims_temp[1:])],
        "out": [linear(next(ki), d_in, d_out)
                for d_in, d_out in zip(out_dims_temp[:-1], out_dims_temp[1:])],
    }
    return params


def denoise_reference(x, timesteps, params, *, emb_size, norm,
                      matmul_dtype=jnp.bfloat16):
    """Pure-JAX reference mirroring the PyTorch forward (no dropout).

    Matmul operands cast to `matmul_dtype` with f32 accumulation to mirror the
    kernel's bf16-MXU / f32-accumulate numerics.
    """
    half = emb_size // 2
    freqs = jnp.exp(-math.log(10000.0)
                    * jnp.arange(half, dtype=jnp.float32) / half)
    temp = jnp.asarray(timesteps, jnp.float32)[:, None] * freqs[None]
    time_emb = jnp.concatenate([jnp.cos(temp), jnp.sin(temp)], axis=-1)
    if emb_size % 2:
        time_emb = jnp.concatenate([time_emb, jnp.zeros_like(time_emb[:, :1])],
                                   axis=-1)
    w_emb, b_emb = params["emb"]
    emb = time_emb @ jnp.asarray(w_emb, jnp.float32).T + b_emb
    xx = jnp.asarray(x, jnp.float32)
    if norm:
        xx = xx / jnp.maximum(jnp.linalg.norm(xx, axis=-1, keepdims=True), 1e-12)
    h = jnp.concatenate([xx, emb], axis=-1)

    def mm(a, w):
        wt = jnp.asarray(w, jnp.float32).T.astype(matmul_dtype)
        return jnp.dot(a.astype(matmul_dtype), wt,
                       preferred_element_type=jnp.float32)

    for (w, b) in params["in"]:
        h = jnp.tanh(mm(h, w) + b)
    for i, (w, b) in enumerate(params["out"]):
        h = mm(h, w) + b
        if i != len(params["out"]) - 1:
            h = jnp.tanh(h)
    return h


if __name__ == "__main__":
    key = jax.random.PRNGKey(0)

    # --- config 1: multi-layer MLP, no norm, deterministic path ---------------
    B1, in_dims1, out_dims1, emb1 = 8, [64, 48, 32], [32, 48, 64], 16
    k1x, k1t, k1p, key = jax.random.split(key, 4)
    x1 = jax.random.normal(k1x, (B1, in_dims1[0]), dtype=jnp.float32)
    t1 = jax.random.randint(k1t, (B1,), 0, 1000, dtype=jnp.int32)
    p1 = init_denoise_params(k1p, in_dims1, out_dims1, emb1)

    out1 = denoise_forward(x1, t1, p1, emb_size=emb1, norm=False,
                           mess_dropout=False)
    out1 = jax.block_until_ready(out1)
    ref1 = denoise_reference(x1, t1, p1, emb_size=emb1, norm=False)
    np.testing.assert_allclose(np.asarray(out1), np.asarray(ref1),
                               rtol=2e-3, atol=2e-3)

    # --- config 2: B not multiple of tile (ragged last block), norm path ------
    B2, in_dims2, out_dims2, emb2 = 12, [48, 24], [24, 48], 16
    k2x, k2t, k2p, key = jax.random.split(key, 4)
    x2 = jax.random.normal(k2x, (B2, in_dims2[0]), dtype=jnp.float32)
    t2 = jax.random.randint(k2t, (B2,), 0, 1000, dtype=jnp.int32)
    p2 = init_denoise_params(k2p, in_dims2, out_dims2, emb2)

    out2 = denoise_forward(x2, t2, p2, emb_size=emb2, norm=True,
                           mess_dropout=False)
    out2 = jax.block_until_ready(out2)
    ref2 = denoise_reference(x2, t2, p2, emb_size=emb2, norm=True)
    np.testing.assert_allclose(np.asarray(out2), np.asarray(ref2),
                               rtol=2e-3, atol=2e-3)

    # --- config 3: dropout path ------------------------------------------------
    # TODO(synk): dropout cannot reproduce torch's mask bit-for-bit; semantics
    # (zero w.p. p, scale by 1/(1-p)) match, so only check it runs and is finite.
    out3 = denoise_forward(x1, t1, p1, emb_size=emb1, norm=False,
                           mess_dropout=True, dropout_p=0.5, seed=123)
    out3 = jax.block_until_ready(out3)
    assert out3.shape == (B1, out_dims1[-1])
    assert bool(jnp.all(jnp.isfinite(out3)))

    print("KERNEL_OK")
</pallas_src>

<mosaic_0001>
module attributes {stable_mosaic.version = 11 : i64} {
  func.func @kernel(%arg0: i32, %arg1: memref<1xi32, #tpu.memory_space<smem>>, %arg2: memref<8x64xf32, #tpu.memory_space<vmem>>, %arg3: memref<8x1xf32, #tpu.memory_space<vmem>>, %arg4: memref<1x8xf32, #tpu.memory_space<vmem>>, %arg5: memref<8x128xf32, #tpu.memory_space<vmem>>, %arg6: memref<8x128xf32, #tpu.memory_space<vmem>>, %arg7: memref<1x128xf32, #tpu.memory_space<vmem>>, %arg8: memref<64x128xbf16, #tpu.memory_space<vmem>>, %arg9: memref<128x128xbf16, #tpu.memory_space<vmem>>, %arg10: memref<1x128xf32, #tpu.memory_space<vmem>>, %arg11: memref<128x128xbf16, #tpu.memory_space<vmem>>, %arg12: memref<1x128xf32, #tpu.memory_space<vmem>>, %arg13: memref<128x128xbf16, #tpu.memory_space<vmem>>, %arg14: memref<1x128xf32, #tpu.memory_space<vmem>>, %arg15: memref<128x128xbf16, #tpu.memory_space<vmem>>, %arg16: memref<1x128xf32, #tpu.memory_space<vmem>>, %arg17: memref<8x128xf32, #tpu.memory_space<vmem>>) attributes {dimension_semantics = [#tpu.dimension_semantics<parallel>], iteration_bounds = array<i64: 1>, scalar_prefetch = 1 : i64, scratch_operands = 0 : i64, tpu.core_type = #tpu.core_type<tc>, window_params = [{transform_indices = @transform_0, window_bounds = array<i64: 8, 64>}, {transform_indices = @transform_1, window_bounds = array<i64: 8, 1>}, {pipeline_mode = #tpu.pipeline_mode<synchronous>, transform_indices = @transform_2, window_bounds = array<i64: 1, 8>}, {pipeline_mode = #tpu.pipeline_mode<synchronous>, transform_indices = @transform_3, window_bounds = array<i64: 8, 128>}, {pipeline_mode = #tpu.pipeline_mode<synchronous>, transform_indices = @transform_4, window_bounds = array<i64: 8, 128>}, {pipeline_mode = #tpu.pipeline_mode<synchronous>, transform_indices = @transform_5, window_bounds = array<i64: 1, 128>}, {pipeline_mode = #tpu.pipeline_mode<synchronous>, transform_indices = @transform_6, window_bounds = array<i64: 64, 128>}, {pipeline_mode = #tpu.pipeline_mode<synchronous>, transform_indices = @transform_7, window_bounds = array<i64: 128, 128>}, {pipeline_mode = #tpu.pipeline_mode<synchronous>, transform_indices = @transform_8, window_bounds = array<i64: 1, 128>}, {pipeline_mode = #tpu.pipeline_mode<synchronous>, transform_indices = @transform_9, window_bounds = array<i64: 128, 128>}, {pipeline_mode = #tpu.pipeline_mode<synchronous>, transform_indices = @transform_10, window_bounds = array<i64: 1, 128>}, {pipeline_mode = #tpu.pipeline_mode<synchronous>, transform_indices = @transform_11, window_bounds = array<i64: 128, 128>}, {pipeline_mode = #tpu.pipeline_mode<synchronous>, transform_indices = @transform_12, window_bounds = array<i64: 1, 128>}, {pipeline_mode = #tpu.pipeline_mode<synchronous>, transform_indices = @transform_13, window_bounds = array<i64: 128, 128>}, {pipeline_mode = #tpu.pipeline_mode<synchronous>, transform_indices = @transform_14, window_bounds = array<i64: 1, 128>}, {transform_indices = @transform_15, window_bounds = array<i64: 8, 128>}]} {
    %c0 = arith.constant 0 : index
    %c0_0 = arith.constant 0 : index
    %0 = vector.load %arg3[%c0, %c0_0] : memref<8x1xf32, #tpu.memory_space<vmem>>, vector<8x1xf32>
    %c0_1 = arith.constant 0 : index
    %c0_2 = arith.constant 0 : index
    %1 = vector.load %arg4[%c0_1, %c0_2] : memref<1x8xf32, #tpu.memory_space<vmem>>, vector<1x8xf32>
    %2 = vector.broadcast %0 : vector<8x1xf32> to vector<8x8xf32>
    %3 = vector.broadcast %1 : vector<1x8xf32> to vector<8x8xf32>
    %4 = arith.mulf %2, %3 : vector<8x8xf32>
    %5 = math.cos %4 : vector<8x8xf32>
    %c0_3 = arith.constant 0 : index
    %c0_4 = arith.constant 0 : index
    %6 = vector.load %arg5[%c0_3, %c0_4] : memref<8x128xf32, #tpu.memory_space<vmem>>, vector<8x128xf32>
    %cst = arith.constant dense<0.000000e+00> : vector<8x128xf32>
    %7 = tpu.matmul %5, %6, %cst {dimension_numbers = #tpu.dot_dimension_numbers<[1], [0], [0], [1], [0, 0, 1, 1], [], []>} : vector<8x8xf32>, vector<8x128xf32>, vector<8x128xf32> -> vector<8x128xf32>
    %8 = math.sin %4 : vector<8x8xf32>
    %c0_5 = arith.constant 0 : index
    %c0_6 = arith.constant 0 : index
    %9 = vector.load %arg6[%c0_5, %c0_6] : memref<8x128xf32, #tpu.memory_space<vmem>>, vector<8x128xf32>
    %cst_7 = arith.constant dense<0.000000e+00> : vector<8x128xf32>
    %10 = tpu.matmul %8, %9, %cst_7 {dimension_numbers = #tpu.dot_dimension_numbers<[1], [0], [0], [1], [0, 0, 1, 1], [], []>} : vector<8x8xf32>, vector<8x128xf32>, vector<8x128xf32> -> vector<8x128xf32>
    %11 = arith.addf %7, %10 : vector<8x128xf32>
    %c0_8 = arith.constant 0 : index
    %c0_9 = arith.constant 0 : index
    %12 = vector.load %arg7[%c0_8, %c0_9] : memref<1x128xf32, #tpu.memory_space<vmem>>, vector<1x128xf32>
    %13 = vector.broadcast %12 : vector<1x128xf32> to vector<8x128xf32>
    %14 = arith.addf %11, %13 : vector<8x128xf32>
    %c0_10 = arith.constant 0 : index
    %c0_11 = arith.constant 0 : index
    %15 = vector.load %arg2[%c0_10, %c0_11] : memref<8x64xf32, #tpu.memory_space<vmem>>, vector<8x64xf32>
    %16 = arith.truncf %15 : vector<8x64xf32> to vector<8x64xbf16>
    %c0_12 = arith.constant 0 : index
    %c0_13 = arith.constant 0 : index
    %17 = vector.load %arg8[%c0_12, %c0_13] : memref<64x128xbf16, #tpu.memory_space<vmem>>, vector<64x128xbf16>
    %cst_14 = arith.constant dense<0.000000e+00> : vector<8x128xf32>
    %18 = tpu.matmul %16, %17, %cst_14 {dimension_numbers = #tpu.dot_dimension_numbers<[1], [0], [0], [1], [0, 0, 1, 1], [], []>} : vector<8x64xbf16>, vector<64x128xbf16>, vector<8x128xf32> -> vector<8x128xf32>
    %19 = arith.truncf %14 : vector<8x128xf32> to vector<8x128xbf16>
    %c0_15 = arith.constant 0 : index
    %c0_16 = arith.constant 0 : index
    %20 = vector.load %arg9[%c0_15, %c0_16] : memref<128x128xbf16, #tpu.memory_space<vmem>>, vector<128x128xbf16>
    %cst_17 = arith.constant dense<0.000000e+00> : vector<8x128xf32>
    %21 = tpu.matmul %19, %20, %cst_17 {dimension_numbers = #tpu.dot_dimension_numbers<[1], [0], [0], [1], [0, 0, 1, 1], [], []>} : vector<8x128xbf16>, vector<128x128xbf16>, vector<8x128xf32> -> vector<8x128xf32>
    %22 = arith.addf %18, %21 : vector<8x128xf32>
    %c0_18 = arith.constant 0 : index
    %c0_19 = arith.constant 0 : index
    %23 = vector.load %arg10[%c0_18, %c0_19] : memref<1x128xf32, #tpu.memory_space<vmem>>, vector<1x128xf32>
    %24 = vector.broadcast %23 : vector<1x128xf32> to vector<8x128xf32>
    %25 = arith.addf %22, %24 : vector<8x128xf32>
    %26 = math.tanh %25 : vector<8x128xf32>
    %27 = arith.truncf %26 : vector<8x128xf32> to vector<8x128xbf16>
    %c0_20 = arith.constant 0 : index
    %c0_21 = arith.constant 0 : index
    %28 = vector.load %arg11[%c0_20, %c0_21] : memref<128x128xbf16, #tpu.memory_space<vmem>>, vector<128x128xbf16>
    %cst_22 = arith.constant dense<0.000000e+00> : vector<8x128xf32>
    %29 = tpu.matmul %27, %28, %cst_22 {dimension_numbers = #tpu.dot_dimension_numbers<[1], [0], [0], [1], [0, 0, 1, 1], [], []>} : vector<8x128xbf16>, vector<128x128xbf16>, vector<8x128xf32> -> vector<8x128xf32>
    %c0_23 = arith.constant 0 : index
    %c0_24 = arith.constant 0 : index
    %30 = vector.load %arg12[%c0_23, %c0_24] : memref<1x128xf32, #tpu.memory_space<vmem>>, vector<1x128xf32>
    %31 = vector.broadcast %30 : vector<1x128xf32> to vector<8x128xf32>
    %32 = arith.addf %29, %31 : vector<8x128xf32>
    %33 = math.tanh %32 : vector<8x128xf32>
    %34 = arith.truncf %33 : vector<8x128xf32> to vector<8x128xbf16>
    %c0_25 = arith.constant 0 : index
    %c0_26 = arith.constant 0 : index
    %35 = vector.load %arg13[%c0_25, %c0_26] : memref<128x128xbf16, #tpu.memory_space<vmem>>, vector<128x128xbf16>
    %cst_27 = arith.constant dense<0.000000e+00> : vector<8x128xf32>
    %36 = tpu.matmul %34, %35, %cst_27 {dimension_numbers = #tpu.dot_dimension_numbers<[1], [0], [0], [1], [0, 0, 1, 1], [], []>} : vector<8x128xbf16>, vector<128x128xbf16>, vector<8x128xf32> -> vector<8x128xf32>
    %c0_28 = arith.constant 0 : index
    %c0_29 = arith.constant 0 : index
    %37 = vector.load %arg14[%c0_28, %c0_29] : memref<1x128xf32, #tpu.memory_space<vmem>>, vector<1x128xf32>
    %38 = vector.broadcast %37 : vector<1x128xf32> to vector<8x128xf32>
    %39 = arith.addf %36, %38 : vector<8x128xf32>
    %40 = math.tanh %39 : vector<8x128xf32>
    %41 = arith.truncf %40 : vector<8x128xf32> to vector<8x128xbf16>
    %c0_30 = arith.constant 0 : index
    %c0_31 = arith.constant 0 : index
    %42 = vector.load %arg15[%c0_30, %c0_31] : memref<128x128xbf16, #tpu.memory_space<vmem>>, vector<128x128xbf16>
    %cst_32 = arith.constant dense<0.000000e+00> : vector<8x128xf32>
    %43 = tpu.matmul %41, %42, %cst_32 {dimension_numbers = #tpu.dot_dimension_numbers<[1], [0], [0], [1], [0, 0, 1, 1], [], []>} : vector<8x128xbf16>, vector<128x128xbf16>, vector<8x128xf32> -> vector<8x128xf32>
    %c0_33 = arith.constant 0 : index
    %c0_34 = arith.constant 0 : index
    %44 = vector.load %arg16[%c0_33, %c0_34] : memref<1x128xf32, #tpu.memory_space<vmem>>, vector<1x128xf32>
    %45 = vector.broadcast %44 : vector<1x128xf32> to vector<8x128xf32>
    %46 = arith.addf %43, %45 : vector<8x128xf32>
    %c0_35 = arith.constant 0 : index
    %c0_36 = arith.constant 0 : index
    %47 = vector.load %arg17[%c0_35, %c0_36] : memref<8x128xf32, #tpu.memory_space<vmem>>, vector<8x128xf32>
    tpu.vector_store %arg17[%c0_35, %c0_36], %46 {strides = array<i32>} : memref<8x128xf32, #tpu.memory_space<vmem>>, vector<8x128xf32>,
    return
  }
  func.func @transform_0(%arg0: i32, %arg1: memref<1xi32, #tpu.memory_space<smem>>) -> (i32, i32) {
    %c0_i32 = arith.constant 0 : i32
    %c0_i32_0 = arith.constant 0 : i32
    return %arg0, %c0_i32 : i32, i32
  }
  func.func @transform_1(%arg0: i32, %arg1: memref<1xi32, #tpu.memory_space<smem>>) -> (i32, i32) {
    %c0_i32 = arith.constant 0 : i32
    %c0_i32_0 = arith.constant 0 : i32
    return %arg0, %c0_i32 : i32, i32
  }
  func.func @transform_2(%arg0: i32, %arg1: memref<1xi32, #tpu.memory_space<smem>>) -> (i32, i32) {
    %c0_i32 = arith.constant 0 : i32
    %c0_i32_0 = arith.constant 0 : i32
    %c0_i32_1 = arith.constant 0 : i32
    return %c0_i32, %c0_i32_0 : i32, i32
  }
  func.func @transform_3(%arg0: i32, %arg1: memref<1xi32, #tpu.memory_space<smem>>) -> (i32, i32) {
    %c0_i32 = arith.constant 0 : i32
    %c0_i32_0 = arith.constant 0 : i32
    %c0_i32_1 = arith.constant 0 : i32
    return %c0_i32, %c0_i32_0 : i32, i32
  }
  func.func @transform_4(%arg0: i32, %arg1: memref<1xi32, #tpu.memory_space<smem>>) -> (i32, i32) {
    %c0_i32 = arith.constant 0 : i32
    %c0_i32_0 = arith.constant 0 : i32
    %c0_i32_1 = arith.constant 0 : i32
    return %c0_i32, %c0_i32_0 : i32, i32
  }
  func.func @transform_5(%arg0: i32, %arg1: memref<1xi32, #tpu.memory_space<smem>>) -> (i32, i32) {
    %c0_i32 = arith.constant 0 : i32
    %c0_i32_0 = arith.constant 0 : i32
    %c0_i32_1 = arith.constant 0 : i32
    return %c0_i32, %c0_i32_0 : i32, i32
  }
  func.func @transform_6(%arg0: i32, %arg1: memref<1xi32, #tpu.memory_space<smem>>) -> (i32, i32) {
    %c0_i32 = arith.constant 0 : i32
    %c0_i32_0 = arith.constant 0 : i32
    %c0_i32_1 = arith.constant 0 : i32
    return %c0_i32, %c0_i32_0 : i32, i32
  }
  func.func @transform_7(%arg0: i32, %arg1: memref<1xi32, #tpu.memory_space<smem>>) -> (i32, i32) {
    %c0_i32 = arith.constant 0 : i32
    %c0_i32_0 = arith.constant 0 : i32
    %c0_i32_1 = arith.constant 0 : i32
    return %c0_i32, %c0_i32_0 : i32, i32
  }
  func.func @transform_8(%arg0: i32, %arg1: memref<1xi32, #tpu.memory_space<smem>>) -> (i32, i32) {
    %c0_i32 = arith.constant 0 : i32
    %c0_i32_0 = arith.constant 0 : i32
    %c0_i32_1 = arith.constant 0 : i32
    return %c0_i32, %c0_i32_0 : i32, i32
  }
  func.func @transform_9(%arg0: i32, %arg1: memref<1xi32, #tpu.memory_space<smem>>) -> (i32, i32) {
    %c0_i32 = arith.constant 0 : i32
    %c0_i32_0 = arith.constant 0 : i32
    %c0_i32_1 = arith.constant 0 : i32
    return %c0_i32, %c0_i32_0 : i32, i32
  }
  func.func @transform_10(%arg0: i32, %arg1: memref<1xi32, #tpu.memory_space<smem>>) -> (i32, i32) {
    %c0_i32 = arith.constant 0 : i32
    %c0_i32_0 = arith.constant 0 : i32
    %c0_i32_1 = arith.constant 0 : i32
    return %c0_i32, %c0_i32_0 : i32, i32
  }
  func.func @transform_11(%arg0: i32, %arg1: memref<1xi32, #tpu.memory_space<smem>>) -> (i32, i32) {
    %c0_i32 = arith.constant 0 : i32
    %c0_i32_0 = arith.constant 0 : i32
    %c0_i32_1 = arith.constant 0 : i32
    return %c0_i32, %c0_i32_0 : i32, i32
  }
  func.func @transform_12(%arg0: i32, %arg1: memref<1xi32, #tpu.memory_space<smem>>) -> (i32, i32) {
    %c0_i32 = arith.constant 0 : i32
    %c0_i32_0 = arith.constant 0 : i32
    %c0_i32_1 = arith.constant 0 : i32
    return %c0_i32, %c0_i32_0 : i32, i32
  }
  func.func @transform_13(%arg0: i32, %arg1: memref<1xi32, #tpu.memory_space<smem>>) -> (i32, i32) {
    %c0_i32 = arith.constant 0 : i32
    %c0_i32_0 = arith.constant 0 : i32
    %c0_i32_1 = arith.constant 0 : i32
    return %c0_i32, %c0_i32_0 : i32, i32
  }
  func.func @transform_14(%arg0: i32, %arg1: memref<1xi32, #tpu.memory_space<smem>>) -> (i32, i32) {
    %c0_i32 = arith.constant 0 : i32
    %c0_i32_0 = arith.constant 0 : i32
    %c0_i32_1 = arith.constant 0 : i32
    return %c0_i32, %c0_i32_0 : i32, i32
  }
  func.func @transform_15(%arg0: i32, %arg1: memref<1xi32, #tpu.memory_space<smem>>) -> (i32, i32) {
    %c0_i32 = arith.constant 0 : i32
    %c0_i32_0 = arith.constant 0 : i32
    return %arg0, %c0_i32 : i32, i32
  }
}

</mosaic_0001>

<llo_original>
// kernel: tpu_custom_call.1
$region0: #{tpu_custom_call.1}
  #allocation0 [shape = 'u32[]', space=smem, size = 0x4, offset = 0x4, fixed_abs, tag = 'smem constant byte address 0x4 - core index']
  #allocation1 [shape = 'u32[144,128]{1,0:T(1,128)}', space=vmem, size = 0x12000, scoped, tag = 'internal scratch']
  #allocation2 [shape = 's32[1]{0}', space=sflag, size = 0x4, scoped, tag = 'scoped memory for tpu_custom_call.1']
  #allocation3 [shape = 's32[1]{0:T(128)S(6)}', space=smem, size = 0x200, scoped, tag = 'prefetched SMEM operand 0']
  %s0 = inlined_call_operand.<no memory space> [shape: s32[1], index: 0, kind: input, shape index: {}]
  %s1 = inlined_call_operand.hbm [shape: f32[8,64], index: 1, kind: input, shape index: {}]
  %s2 = inlined_call_operand.vmem [shape: f32[8,1], index: 2, kind: input, shape index: {}]
  %s3 = inlined_call_operand.vmem [shape: f32[1,8], index: 3, kind: input, shape index: {}]
  %s4 = inlined_call_operand.hbm [shape: f32[8,128], index: 4, kind: input, shape index: {}]
  %s5 = inlined_call_operand.hbm [shape: f32[8,128], index: 5, kind: input, shape index: {}]
  %s6 = inlined_call_operand.vmem [shape: f32[1,128], index: 6, kind: input, shape index: {}]
  %s7 = inlined_call_operand.vmem [shape: bf16[64,128], index: 7, kind: input, shape index: {}]
  %s8 = inlined_call_operand.hbm [shape: bf16[128,128], index: 8, kind: input, shape index: {}]
  %s9 = inlined_call_operand.vmem [shape: f32[1,128], index: 9, kind: input, shape index: {}]
  %s10 = inlined_call_operand.hbm [shape: bf16[128,128], index: 10, kind: input, shape index: {}]
  %s11 = inlined_call_operand.vmem [shape: f32[1,128], index: 11, kind: input, shape index: {}]
  %s12 = inlined_call_operand.hbm [shape: bf16[128,128], index: 12, kind: input, shape index: {}]
  %s13 = inlined_call_operand.vmem [shape: f32[1,128], index: 13, kind: input, shape index: {}]
  %s14 = inlined_call_operand.hbm [shape: bf16[128,128], index: 14, kind: input, shape index: {}]
  %s15 = inlined_call_operand.vmem [shape: f32[1,128], index: 15, kind: input, shape index: {}]
  %s16 = inlined_call_operand.hbm [shape: f32[8,128], index: 16, kind: output, shape index: {}]
  %s17 = sld [smem:[#allocation0]]
  $region98: #{tpu_custom_call.1} parent=0
    _
  %s19 = ssub.s32 1, %s17
  %s20 = scalar_select 0, %s19, %s17
  %21 = sst [smem:[#allocation3]] %s0
  $region1: #{tpu_custom_call.1} parent=0
    #allocation4 [shape = 'u8[4096]{0}', space=vmem, size = 0x1000, scoped, tag = 'input window, operand 1, single buffered']
    #allocation5 [shape = 's32[1]{0}', space=sflag, size = 0x4, scoped, tag = 'scoped memory for tpu_custom_call.1']
    #allocation6 [shape = 's32[1]{0}', space=sflag, size = 0x4, scoped, tag = 'scoped memory for tpu_custom_call.1']
    #allocation7 [shape = 'u8[4096]{0}', space=vmem, size = 0x1000, scoped, tag = 'input window, operand 4, single buffered']
    #allocation8 [shape = 's32[1]{0}', space=sflag, size = 0x4, scoped, tag = 'scoped memory for tpu_custom_call.1']
    #allocation9 [shape = 'u8[4096]{0}', space=vmem, size = 0x1000, scoped, tag = 'input window, operand 5, single buffered']
    #allocation10 [shape = 'u8[32768]{0}', space=vmem, size = 0x8000, scoped, tag = 'input window, operand 8, single buffered']
    #allocation11 [shape = 's32[1]{0}', space=sflag, size = 0x4, scoped, tag = 'scoped memory for tpu_custom_call.1']
    #allocation12 [shape = 'u8[32768]{0}', space=vmem, size = 0x8000, scoped, tag = 'input window, operand 10, single buffered']
    #allocation13 [shape = 'u8[32768]{0}', space=vmem, size = 0x8000, scoped, tag = 'input window, operand 12, single buffered']
    #allocation14 [shape = 's32[1]{0}', space=sflag, size = 0x4, scoped, tag = 'scoped memory for tpu_custom_call.1']
    #allocation15 [shape = 'u8[32768]{0}', space=vmem, size = 0x8000, scoped, tag = 'input window, operand 14, single buffered']
    #allocation16 [shape = 'u8[4096]{0}', space=vmem, size = 0x1000, scoped, tag = 'output window, operand 0, single buffered']
    %22 = vsyncpa [#allocation5], 0
    %23 = vsyncpa [#allocation8], 0
    %24 = vsyncpa [#allocation11], 0
    %25 = vsyncpa [#allocation14], 0
    %26 = vsyncpa [#allocation6], 0
    // Predicated region
    $region2: #{tpu_custom_call.1} parent=1 // pred_check
      _
    $region3: #{tpu_custom_call.1} parent=1 // pred_check_branch
      %28 = sbr.rel (0) target = $region5
    $region4: #{tpu_custom_call.1} parent=1 // pred_region
      %s30 = ssub.s32 128, 128
      %31 = vsyncadd [#allocation5], %s30
      %s33 = sshll.u32 [#allocation4], 4
      %s34 = int_to_ptr.vmem [resolvable:$true] %s33
      %36 = dma.hbm_to_vmem [thread:$0]  %s1, 128, %s34, [#allocation5]
    $region5: #{tpu_custom_call.1} parent=1 // pred_fallthru
      _
    // Predicated region
    $region6: #{tpu_custom_call.1} parent=1 // pred_check
      _
    $region7: #{tpu_custom_call.1} parent=1 // pred_check_branch
      %38 = sbr.rel (0) target = $region9
    $region8: #{tpu_custom_call.1} parent=1 // pred_region
      _
    $region9: #{tpu_custom_call.1} parent=1 // pred_fallthru
      _
    // Predicated region
    $region10: #{tpu_custom_call.1} parent=1 // pred_check
      _
    $region11: #{tpu_custom_call.1} parent=1 // pred_check_branch
      %40 = sbr.rel (0) target = $region13
    $region12: #{tpu_custom_call.1} parent=1 // pred_region
      _
    $region13: #{tpu_custom_call.1} parent=1 // pred_fallthru
      _
    // Predicated region
    $region14: #{tpu_custom_call.1} parent=1 // pred_check
      _
    $region15: #{tpu_custom_call.1} parent=1 // pred_check_branch
      %42 = sbr.rel (0) target = $region17
    $region16: #{tpu_custom_call.1} parent=1 // pred_region
      %s44 = ssub.s32 128, 128
      %45 = vsyncadd [#allocation8], %s44
      %s47 = sshll.u32 [#allocation7], 4
      %s48 = int_to_ptr.vmem [resolvable:$true] %s47
      %50 = dma.hbm_to_vmem [thread:$0]  %s4, 128, %s48, [#allocation8]
    $region17: #{tpu_custom_call.1} parent=1 // pred_fallthru
      _
    // Predicated region
    $region18: #{tpu_custom_call.1} parent=1 // pred_check
      _
    $region19: #{tpu_custom_call.1} parent=1 // pred_check_branch
      %52 = sbr.rel (0) target = $region21
    $region20: #{tpu_custom_call.1} parent=1 // pred_region
      %s54 = ssub.s32 128, 128
      %55 = vsyncadd [#allocation8], %s54
      %s57 = sshll.u32 [#allocation9], 4
      %s58 = int_to_ptr.vmem [resolvable:$true] %s57
      %60 = dma.hbm_to_vmem [thread:$0]  %s5, 128, %s58, [#allocation8]
    $region21: #{tpu_custom_call.1} parent=1 // pred_fallthru
      _
    // Predicated region
    $region22: #{tpu_custom_call.1} parent=1 // pred_check
      _
    $region23: #{tpu_custom_call.1} parent=1 // pred_check_branch
      %62 = sbr.rel (0) target = $region25
    $region24: #{tpu_custom_call.1} parent=1 // pred_region
      _
    $region25: #{tpu_custom_call.1} parent=1 // pred_fallthru
      _
    // Predicated region
    $region26: #{tpu_custom_call.1} parent=1 // pred_check
      _
    $region27: #{tpu_custom_call.1} parent=1 // pred_check_branch
      %64 = sbr.rel (0) target = $region29
    $region28: #{tpu_custom_call.1} parent=1 // pred_region
      _
    $region29: #{tpu_custom_call.1} parent=1 // pred_fallthru
      _
    // Predicated region
    $region30: #{tpu_custom_call.1} parent=1 // pred_check
      _
    $region31: #{tpu_custom_call.1} parent=1 // pred_check_branch
      %66 = sbr.rel (0) target = $region33
    $region32: #{tpu_custom_call.1} parent=1 // pred_region
      %s68 = ssub.s32 1024, 1024
      %69 = vsyncadd [#allocation11], %s68
      %s70 = sshll.u32 [#allocation10], 4
      %s71 = int_to_ptr.vmem [resolvable:$true] %s70
      %76 = dma.hbm_to_vmem [thread:$0]  %s8, 1024, %s71, [#allocation11], 64, 64, 4
    $region33: #{tpu_custom_call.1} parent=1 // pred_fallthru
      _
    // Predicated region
    $region34: #{tpu_custom_call.1} parent=1 // pred_check
      _
    $region35: #{tpu_custom_call.1} parent=1 // pred_check_branch
      %78 = sbr.rel (0) target = $region37
    $region36: #{tpu_custom_call.1} parent=1 // pred_region
      _
    $region37: #{tpu_custom_call.1} parent=1 // pred_fallthru
      _
    // Predicated region
    $region38: #{tpu_custom_call.1} parent=1 // pred_check
      _
    $region39: #{tpu_custom_call.1} parent=1 // pred_check_branch
      %80 = sbr.rel (0) target = $region41
    $region40: #{tpu_custom_call.1} parent=1 // pred_region
      %s82 = ssub.s32 1024, 1024
      %83 = vsyncadd [#allocation11], %s82
      %s84 = sshll.u32 [#allocation12], 4
      %s85 = int_to_ptr.vmem [resolvable:$true] %s84
      %90 = dma.hbm_to_vmem [thread:$0]  %s10, 1024, %s85, [#allocation11], 64, 64, 4
    $region41: #{tpu_custom_call.1} parent=1 // pred_fallthru
      _
    // Predicated region
    $region42: #{tpu_custom_call.1} parent=1 // pred_check
      _
    $region43: #{tpu_custom_call.1} parent=1 // pred_check_branch
      %92 = sbr.rel (0) target = $region45
    $region44: #{tpu_custom_call.1} parent=1 // pred_region
      _
    $region45: #{tpu_custom_call.1} parent=1 // pred_fallthru
      _
    // Predicated region
    $region46: #{tpu_custom_call.1} parent=1 // pred_check
      _
    $region47: #{tpu_custom_call.1} parent=1 // pred_check_branch
      %94 = sbr.rel (0) target = $region49
    $region48: #{tpu_custom_call.1} parent=1 // pred_region
      %s96 = ssub.s32 1024, 1024
      %97 = vsyncadd [#allocation14], %s96
      %s98 = sshll.u32 [#allocation13], 4
      %s99 = int_to_ptr.vmem [resolvable:$true] %s98
      %104 = dma.hbm_to_vmem [thread:$0]  %s12, 1024, %s99, [#allocation14], 64, 64, 4
    $region49: #{tpu_custom_call.1} parent=1 // pred_fallthru
      _
    // Predicated region
    $region50: #{tpu_custom_call.1} parent=1 // pred_check
      _
    $region51: #{tpu_custom_call.1} parent=1 // pred_check_branch
      %106 = sbr.rel (0) target = $region53
    $region52: #{tpu_custom_call.1} parent=1 // pred_region
      _
    $region53: #{tpu_custom_call.1} parent=1 // pred_fallthru
      _
    // Predicated region
    $region54: #{tpu_custom_call.1} parent=1 // pred_check
      _
    $region55: #{tpu_custom_call.1} parent=1 // pred_check_branch
      %108 = sbr.rel (0) target = $region57
    $region56: #{tpu_custom_call.1} parent=1 // pred_region
      %s110 = ssub.s32 1024, 1024
      %111 = vsyncadd [#allocation14], %s110
      %s112 = sshll.u32 [#allocation15], 4
      %s113 = int_to_ptr.vmem [resolvable:$true] %s112
      %118 = dma.hbm_to_vmem [thread:$0]  %s14, 1024, %s113, [#allocation14], 64, 64, 4
    $region57: #{tpu_custom_call.1} parent=1 // pred_fallthru
      _
    // Predicated region
    $region58: #{tpu_custom_call.1} parent=1 // pred_check
      _
    $region59: #{tpu_custom_call.1} parent=1 // pred_check_branch
      %120 = sbr.rel (0) target = $region61
    $region60: #{tpu_custom_call.1} parent=1 // pred_region
      _
    $region61: #{tpu_custom_call.1} parent=1 // pred_fallthru
      _
    // Predicated region
    $region62: #{tpu_custom_call.1} parent=1 // pred_check
      _
    $region63: #{tpu_custom_call.1} parent=1 // pred_check_branch
      %122 = sbr.rel (0) target = $region65
    $region64: #{tpu_custom_call.1} parent=1 // pred_region
      %123 = dma.done [#allocation5], 128
    $region65: #{tpu_custom_call.1} parent=1 // pred_fallthru
      _
    // Predicated region
    $region66: #{tpu_custom_call.1} parent=1 // pred_check
      _
    $region67: #{tpu_custom_call.1} parent=1 // pred_check_branch
      %125 = sbr.rel (0) target = $region69
    $region68: #{tpu_custom_call.1} parent=1 // pred_region
      %126 = dma.done [#allocation8], 128
    $region69: #{tpu_custom_call.1} parent=1 // pred_fallthru
      _
    // Predicated region
    $region70: #{tpu_custom_call.1} parent=1 // pred_check
      _
    $region71: #{tpu_custom_call.1} parent=1 // pred_check_branch
      %128 = sbr.rel (0) target = $region73
    $region72: #{tpu_custom_call.1} parent=1 // pred_region
      %129 = dma.done [#allocation8], 128
    $region73: #{tpu_custom_call.1} parent=1 // pred_fallthru
      _
    // Predicated region
    $region74: #{tpu_custom_call.1} parent=1 // pred_check
      _
    $region75: #{tpu_custom_call.1} parent=1 // pred_check_branch
      %131 = sbr.rel (0) target = $region77
    $region76: #{tpu_custom_call.1} parent=1 // pred_region
      %132 = dma.done [#allocation11], 1024
    $region77: #{tpu_custom_call.1} parent=1 // pred_fallthru
      _
    // Predicated region
    $region78: #{tpu_custom_call.1} parent=1 // pred_check
      _
    $region79: #{tpu_custom_call.1} parent=1 // pred_check_branch
      %134 = sbr.rel (0) target = $region81
    $region80: #{tpu_custom_call.1} parent=1 // pred_region
      %135 = dma.done [#allocation11], 1024
    $region81: #{tpu_custom_call.1} parent=1 // pred_fallthru
      _
    // Predicated region
    $region82: #{tpu_custom_call.1} parent=1 // pred_check
      _
    $region83: #{tpu_custom_call.1} parent=1 // pred_check_branch
      %137 = sbr.rel (0) target = $region85
    $region84: #{tpu_custom_call.1} parent=1 // pred_region
      %138 = dma.done [#allocation14], 1024
    $region85: #{tpu_custom_call.1} parent=1 // pred_fallthru
      _
    // Predicated region
    $region86: #{tpu_custom_call.1} parent=1 // pred_check
      _
    $region87: #{tpu_custom_call.1} parent=1 // pred_check_branch
      %140 = sbr.rel (0) target = $region89
    $region88: #{tpu_custom_call.1} parent=1 // pred_region
      %141 = dma.done [#allocation14], 1024
    $region89: #{tpu_custom_call.1} parent=1 // pred_fallthru
      _
    %v143 = vld [vmem:[%s2] sm:$0xff]
    %v144 = vld [vmem:[%s3] sm:$0x1]
    %146 = vset.pattern.permute.xlu0 0
    %147 = vperm.xlu0 %146, %v143
    %v148 = vpop.permute.xlu0 %147
    %v151 = vlaneseq
    %v152 = vshrl.u32 %v151, 7
    %v153 = vsub.s32 0, %v152
    %v154 = vrot.slane %v144, %v153
    %v156 = vmul.f32 %v148, %v154
    %v157 = vand.u32 2147483647, %v156
    %vm158 = vcmp.le.f32.partialorder %v157, 0.7853982
    %vm159 = vcmp.lt.s32.totalorder %v156, 0
    %v160 = vand.u32 %v156, 2139095040
    %v161 = vshrl.u32 %v160, 23
    %v162 = vsub.s32 %v161, 127
    %v163 = vand.u32 2147483647, %v156
    %v164 = vand.u32 %v163, 8388607
    %v165 = vor.u32 %v164, 8388608
    %v166 = vsub.s32 0, %v165
    %v167 = vadd.s32 %v162, 1
    %vm168 = vcmp.gt.s32.totalorder %v167, 0
    %v169 = vsel %vm168, %v167, 0
    %v170 = vshrl.u32 %v169, 5
    %v171 = vand.u32 %v169, 31
    %v172 = vsub.s32 32, %v171
    %v173 = vshrl.u32 683565275, %v172
    %v174 = vshll.u32 683565275, %v171
    %v175 = vshrl.u32 2475754826, %v172
    %v176 = vor.u32 %v174, %v175
    %v177 = vshll.u32 2475754826, %v171
    %v178 = vshrl.u32 2131351028, %v172
    %v179 = vor.u32 %v177, %v178
    %v180 = vshll.u32 2131351028, %v171
    %v181 = vshrl.u32 2102212464, %v172
    %v182 = vor.u32 %v180, %v181
    %v183 = vshll.u32 2102212464, %v171
    %v184 = vshrl.u32 920167782, %v172
    %v185 = vor.u32 %v183, %v184
    %v186 = vshll.u32 920167782, %v171
    %v187 = vshrl.u32 1326507024, %v172
    %v188 = vor.u32 %v186, %v187
    %vm189 = vcmp.lt.s32.totalorder %v170, 1
    %vm190 = vcmp.lt.s32.totalorder %v170, 2
    %vm191 = vcmp.lt.s32.totalorder %v170, 3
    %vm192 = vcmp.lt.s32.totalorder %v170, 4
    %v193 = vsel %vm189, %v173, %v176
    %v194 = vsel %vm192, %v182, 2102212464
    %v195 = vsel %vm191, %v179, %v194
    %v196 = vsel %vm190, %v193, %v195
    %v197 = vsel %vm189, %v176, %v179
    %v198 = vsel %vm192, %v185, 920167782
    %v199 = vsel %vm191, %v182, %v198
    %v200 = vsel %vm190, %v197, %v199
    %v201 = vsel %vm189, %v179, %v182
    %v202 = vsel %vm192, %v188, 1326507024
    %v203 = vsel %vm191, %v185, %v202
    %v204 = vsel %vm190, %v201, %v203
    %v205 = vshll.u32 %v165, 8
    %v206 = vmul.u32.u64.compose %v205, %v204
    %v207 = vextract.low.u32 %v206
    %v208 = vextract.high.u32 %v206
    %v209 = vmul.u32.u64.compose %v205, %v200
    %v210 = vextract.low.u32 %v209
    %v211 = vextract.high.u32 %v209
    %v212 = vmul.u32 %v205, %v196
    %v213 = vadd.s32 %v208, %v210
    %vm214 = vc.u32 %v208, %v210
    %v215 = vadd.s32 %v211, 1
    %v216 = vsel %vm214, %v215, %v211
    %v217 = vadd.s32 %v212, %v216
    %v218 = vadd.s32 %v217, 536870912
    %v219 = vshrl.u32 %v218, 30
    %v220 = vshll.u32 %v219, 30
    %v221 = vsub.s32 %v217, %v220
    %vm222 = vcmp.lt.s32.totalorder %v221, 0
    %v223 = vsub.s32 0, %v221
    %v224 = vsel %vm222, %v223, %v221
    %v225 = vclz %v224
    %v226 = vsub.s32 %v225, 2
    %vm227 = vcmp.gt.s32.totalorder 0, %v226
    %v228 = vsel %vm227, 0, %v226
    %v229 = vsub.s32 32, %v228
    %v230 = vshll.u32 %v221, %v228
    %v231 = vshrl.u32 %v213, %v229
    %v232 = vor.u32 %v230, %v231
    %v233 = vsub.s32 4294967266, %v228
    %v234 = vadd.s32 %v233, 127
    %v235 = vshll.u32 %v234, 23
    %v236 = vor.u32 4788187, %v235
    %v237 = vand.u32 2147483647, %v236
    %v239 = vcvt.s32.f32 %v232
    %v240 = vmul.f32 %v239, %v237
    %v241 = vxor.u32 %v240, 2147483648
    %v242 = vsel %vm159, %v241, %v240
    %v243 = vsub.s32 4, %v219
    %v244 = vsel %vm159, %v243, %v219
    %v245 = vsel %vm158, %v156, %v242
    %v246 = vsel %vm158, 0, %v244
    %v247 = vcosq.f32.pop %v245
    %v248 = vsinq.f32.pop %v245
    %vm249 = vweird.f32 %v156
    %v250 = vand.u32 %v246, 3
    %vm251 = vcmp.lt.s32.totalorder %v250, 2
    %vm252 = vcmp.eq.s32.totalorder %v250, 0
    %v253 = vxor.u32 %v248, 2147483648
    %v254 = vsel %vm252, %v247, %v253
    %vm255 = vcmp.eq.s32.totalorder %v250, 2
    %v256 = vxor.u32 %v247, 2147483648
    %v257 = vsel %vm255, %v256, %v248
    %v258 = vsel %vm251, %v254, %v257
    %v259 = vsel %vm249, nan, %v258
    %v260 = vld [vmem:[#allocation7] sm:$0xff]
    %v261 = vand.u32 2147483647, %v156
    %vm262 = vcmp.le.f32.partialorder %v261, 0.7853982
    %vm263 = vcmp.lt.s32.totalorder %v156, 0
    %v264 = vand.u32 %v156, 2139095040
    %v265 = vshrl.u32 %v264, 23
    %v266 = vsub.s32 %v265, 127
    %v267 = vand.u32 2147483647, %v156
    %v268 = vand.u32 %v267, 8388607
    %v269 = vor.u32 %v268, 8388608
    %v270 = vsub.s32 0, %v269
    %v271 = vadd.s32 %v266, 1
    %vm272 = vcmp.gt.s32.totalorder %v271, 0
    %v273 = vsel %vm272, %v271, 0
    %v274 = vshrl.u32 %v273, 5
    %v275 = vand.u32 %v273, 31
    %v276 = vsub.s32 32, %v275
    %v277 = vshrl.u32 683565275, %v276
    %v278 = vshll.u32 683565275, %v275
    %v279 = vshrl.u32 2475754826, %v276
    %v280 = vor.u32 %v278, %v279
    %v281 = vshll.u32 2475754826, %v275
    %v282 = vshrl.u32 2131351028, %v276
    %v283 = vor.u32 %v281, %v282
    %v284 = vshll.u32 2131351028, %v275
    %v285 = vshrl.u32 2102212464, %v276
    %v286 = vor.u32 %v284, %v285
    %v287 = vshll.u32 2102212464, %v275
    %v288 = vshrl.u32 920167782, %v276
    %v289 = vor.u32 %v287, %v288
    %v290 = vshll.u32 920167782, %v275
    %v291 = vshrl.u32 1326507024, %v276
    %v292 = vor.u32 %v290, %v291
    %vm293 = vcmp.lt.s32.totalorder %v274, 1
    %vm294 = vcmp.lt.s32.totalorder %v274, 2
    %vm295 = vcmp.lt.s32.totalorder %v274, 3
    %vm296 = vcmp.lt.s32.totalorder %v274, 4
    %v297 = vsel %vm293, %v277, %v280
    %v298 = vsel %vm296, %v286, 2102212464
    %v299 = vsel %vm295, %v283, %v298
    %v300 = vsel %vm294, %v297, %v299
    %v301 = vsel %vm293, %v280, %v283
    %v302 = vsel %vm296, %v289, 920167782
    %v303 = vsel %vm295, %v286, %v302
    %v304 = vsel %vm294, %v301, %v303
    %v305 = vsel %vm293, %v283, %v286
    %v306 = vsel %vm296, %v292, 1326507024
    %v307 = vsel %vm295, %v289, %v306
    %v308 = vsel %vm294, %v305, %v307
    %v309 = vshll.u32 %v269, 8
    %v310 = vmul.u32.u64.compose %v309, %v308
    %v311 = vextract.low.u32 %v310
    %v312 = vextract.high.u32 %v310
    %v313 = vmul.u32.u64.compose %v309, %v304
    %v314 = vextract.low.u32 %v313
    %v315 = vextract.high.u32 %v313
    %v316 = vmul.u32 %v309, %v300
    %v317 = vadd.s32 %v312, %v314
    %vm318 = vc.u32 %v312, %v314
    %v319 = vadd.s32 %v315, 1
    %v320 = vsel %vm318, %v319, %v315
    %v321 = vadd.s32 %v316, %v320
    %v322 = vadd.s32 %v321, 536870912
    %v323 = vshrl.u32 %v322, 30
    %v324 = vshll.u32 %v323, 30
    %v325 = vsub.s32 %v321, %v324
    %vm326 = vcmp.lt.s32.totalorder %v325, 0
    %v327 = vsub.s32 0, %v325
    %v328 = vsel %vm326, %v327, %v325
    %v329 = vclz %v328
    %v330 = vsub.s32 %v329, 2
    %vm331 = vcmp.gt.s32.totalorder 0, %v330
    %v332 = vsel %vm331, 0, %v330
    %v333 = vsub.s32 32, %v332
    %v334 = vshll.u32 %v325, %v332
    %v335 = vshrl.u32 %v317, %v333
    %v336 = vor.u32 %v334, %v335
    %v337 = vsub.s32 4294967266, %v332
    %v338 = vadd.s32 %v337, 127
    %v339 = vshll.u32 %v338, 23
    %v340 = vor.u32 4788187, %v339
    %v341 = vand.u32 2147483647, %v340
    %v343 = vcvt.s32.f32 %v336
    %v344 = vmul.f32 %v343, %v341
    %v345 = vxor.u32 %v344, 2147483648
    %v346 = vsel %vm263, %v345, %v344
    %v347 = vsub.s32 4, %v323
    %v348 = vsel %vm263, %v347, %v323
    %v349 = vsel %vm262, %v156, %v346
    %v350 = vsel %vm262, 0, %v348
    %v351 = vcosq.f32.pop %v349
    %v352 = vsinq.f32.pop %v349
    %vm353 = vweird.f32 %v156
    %v354 = vadd.s32 %v350, 3
    %v355 = vand.u32 %v354, 3
    %vm356 = vcmp.lt.s32.totalorder %v355, 2
    %vm357 = vcmp.eq.s32.totalorder %v355, 0
    %v358 = vxor.u32 %v352, 2147483648
    %v359 = vsel %vm357, %v351, %v358
    %vm360 = vcmp.eq.s32.totalorder %v355, 2
    %v361 = vxor.u32 %v351, 2147483648
    %v362 = vsel %vm360, %v361, %v352
    %v363 = vsel %vm356, %v359, %v362
    %v364 = vsel %vm353, nan, %v363
    %v365 = vld [vmem:[#allocation9] sm:$0xff]
    %vm366 = vcmask 64512
    %v368 = vsel %vm366, %v364, 0
    %370 = vmatprep.subr.mxu0 0.0
    %371 = vmatpush1.msra.mxu0 %v365
    %372 = vmatprep.subr.mxu0 0.0
    %373 = vmatpush1.msra.mxu0 0.0
    %374 = vmatprep.subr.mxu0 0.0
    %375 = vmatpush1.msra.mxu0 0.0
    %376 = vmatprep.subr.mxu0 0.0
    %377 = vmatpush1.msra.mxu0 0.0
    %378 = vmatprep.subr.mxu0 0.0
    %379 = vmatpush1.msra.mxu0 0.0
    %380 = vmatprep.subr.mxu0 0.0
    %381 = vmatpush1.msra.mxu0 0.0
    %382 = vmatprep.subr.mxu0 0.0
    %383 = vmatpush1.msra.mxu0 0.0
    %384 = vmatprep.subr.mxu0 0.0
    %385 = vmatpush1.msra.mxu0 0.0
    %386 = vmatprep.subr.mxu0 0.0
    %387 = vmatpush1.msra.mxu0 0.0
    %388 = vmatprep.subr.mxu0 0.0
    %389 = vmatpush1.msra.mxu0 0.0
    %390 = vmatprep.subr.mxu0 0.0
    %391 = vmatpush1.msra.mxu0 0.0
    %392 = vmatprep.subr.mxu0 0.0
    %393 = vmatpush1.msra.mxu0 0.0
    %394 = vmatprep.subr.mxu0 0.0
    %395 = vmatpush1.msra.mxu0 0.0
    %396 = vmatprep.subr.mxu0 0.0
    %397 = vmatpush1.msra.mxu0 0.0
    %398 = vmatprep.subr.mxu0 0.0
    %399 = vmatpush1.msra.mxu0 0.0
    %400 = vmatprep.subr.mxu0 0.0
    %401 = vmatpush1.msra.mxu0 0.0
    %402 = vmatprep.subr.mxu0 0.0
    %403 = vmatpush1.msra.mxu0 0.0
    %404 = vmatprep.subr.mxu0 0.0
    %405 = vmatpush1.msra.mxu0 0.0
    %406 = vmatprep.subr.mxu0 0.0
    %407 = vmatpush1.msra.mxu0 0.0
    %408 = vmatprep.subr.mxu0 0.0
    %409 = vmatpush1.msra.mxu0 0.0
    %410 = vmatprep.subr.mxu0 0.0
    %411 = vmatpush1.msra.mxu0 0.0
    %412 = vmatprep.subr.mxu0 0.0
    %413 = vmatpush1.msra.mxu0 0.0
    %414 = vmatprep.subr.mxu0 0.0
    %415 = vmatpush1.msra.mxu0 0.0
    %416 = vmatprep.subr.mxu0 0.0
    %417 = vmatpush1.msra.mxu0 0.0
    %418 = vmatprep.subr.mxu0 0.0
    %419 = vmatpush1.msra.mxu0 0.0
    %420 = vmatprep.subr.mxu0 0.0
    %421 = vmatpush1.msra.mxu0 0.0
    %422 = vmatprep.subr.mxu0 0.0
    %423 = vmatpush1.msra.mxu0 0.0
    %424 = vmatprep.subr.mxu0 0.0
    %425 = vmatpush1.msra.mxu0 0.0
    %426 = vmatprep.subr.mxu0 0.0
    %427 = vmatpush1.msra.mxu0 0.0
    %428 = vmatprep.subr.mxu0 0.0
    %429 = vmatpush1.msra.mxu0 0.0
    %430 = vmatprep.subr.mxu0 0.0
    %431 = vmatpush1.msra.mxu0 0.0
    %432 = vmatprep.subr.mxu0 0.0
    %433 = vmatpush1.msra.mxu0 0.0
    %434 = vmatprep.mubr.f32.mxu0 0.0
    %435 = vmatmul.mubr.f32.gmra.mrb[0].mxu0 %v368
    %v436 = vpop.f32.mrb[0].mxu0
    %v437 = vadd.f32 0.0, %v436
    %v438 = vpop.f32.mrb[0].mxu0
    %439 = vdwg.mxu0
    %v441 = vsel %vm366, %v259, 0
    %443 = vmatprep.subr.mxu0 0.0
    %444 = vmatpush1.msra.mxu0 %v260
    %445 = vmatprep.subr.mxu0 0.0
    %446 = vmatpush1.msra.mxu0 0.0
    %447 = vmatprep.subr.mxu0 0.0
    %448 = vmatpush1.msra.mxu0 0.0
    %449 = vmatprep.subr.mxu0 0.0
    %450 = vmatpush1.msra.mxu0 0.0
    %451 = vmatprep.subr.mxu0 0.0
    %452 = vmatpush1.msra.mxu0 0.0
    %453 = vmatprep.subr.mxu0 0.0
    %454 = vmatpush1.msra.mxu0 0.0
    %455 = vmatprep.subr.mxu0 0.0
    %456 = vmatpush1.msra.mxu0 0.0
    %457 = vmatprep.subr.mxu0 0.0
    %458 = vmatpush1.msra.mxu0 0.0
    %459 = vmatprep.subr.mxu0 0.0
    %460 = vmatpush1.msra.mxu0 0.0
    %461 = vmatprep.subr.mxu0 0.0
    %462 = vmatpush1.msra.mxu0 0.0
    %463 = vmatprep.subr.mxu0 0.0
    %464 = vmatpush1.msra.mxu0 0.0
    %465 = vmatprep.subr.mxu0 0.0
    %466 = vmatpush1.msra.mxu0 0.0
    %467 = vmatprep.subr.mxu0 0.0
    %468 = vmatpush1.msra.mxu0 0.0
    %469 = vmatprep.subr.mxu0 0.0
    %470 = vmatpush1.msra.mxu0 0.0
    %471 = vmatprep.subr.mxu0 0.0
    %472 = vmatpush1.msra.mxu0 0.0
    %473 = vmatprep.subr.mxu0 0.0
    %474 = vmatpush1.msra.mxu0 0.0
    %475 = vmatprep.subr.mxu0 0.0
    %476 = vmatpush1.msra.mxu0 0.0
    %477 = vmatprep.subr.mxu0 0.0
    %478 = vmatpush1.msra.mxu0 0.0
    %479 = vmatprep.subr.mxu0 0.0
    %480 = vmatpush1.msra.mxu0 0.0
    %481 = vmatprep.subr.mxu0 0.0
    %482 = vmatpush1.msra.mxu0 0.0
    %483 = vmatprep.subr.mxu0 0.0
    %484 = vmatpush1.msra.mxu0 0.0
    %485 = vmatprep.subr.mxu0 0.0
    %486 = vmatpush1.msra.mxu0 0.0
    %487 = vmatprep.subr.mxu0 0.0
    %488 = vmatpush1.msra.mxu0 0.0
    %489 = vmatprep.subr.mxu0 0.0
    %490 = vmatpush1.msra.mxu0 0.0
    %491 = vmatprep.subr.mxu0 0.0
    %492 = vmatpush1.msra.mxu0 0.0
    %493 = vmatprep.subr.mxu0 0.0
    %494 = vmatpush1.msra.mxu0 0.0
    %495 = vmatprep.subr.mxu0 0.0
    %496 = vmatpush1.msra.mxu0 0.0
    %497 = vmatprep.subr.mxu0 0.0
    %498 = vmatpush1.msra.mxu0 0.0
    %499 = vmatprep.subr.mxu0 0.0
    %500 = vmatpush1.msra.mxu0 0.0
    %501 = vmatprep.subr.mxu0 0.0
    %502 = vmatpush1.msra.mxu0 0.0
    %503 = vmatprep.subr.mxu0 0.0
    %504 = vmatpush1.msra.mxu0 0.0
    %505 = vmatprep.subr.mxu0 0.0
    %506 = vmatpush1.msra.mxu0 0.0
    %507 = vmatprep.mubr.f32.mxu0 0.0
    %508 = vmatmul.mubr.f32.gmra.mrb[0].mxu0 %v441
    %v509 = vpop.f32.mrb[0].mxu0
    %v510 = vadd.f32 %v437, %v509
    %v511 = vpop.f32.mrb[0].mxu0
    %512 = vdwg.mxu0
    %v513 = vld [vmem:[%s6] sm:$0x1]
    %v515 = vlaneseq
    %v516 = vshrl.u32 %v515, 7
    %v517 = vsub.s32 0, %v516
    %v518 = vrot.slane %v513, %v517
    %v520 = vadd.f32 %v510, %v518
    %v521 = vld [vmem:[#allocation4] sm:$0xff]
    %v522 = vpack.c.bf16 %v521, %v521
    %v523 = vld [vmem:[%s7] sm:$0xf]
    %v524 = vld [vmem:[%s7 + $0x4] sm:$0xf]
    %v525 = vld [vmem:[%s7 + $0x8] sm:$0xf]
    %v526 = vld [vmem:[%s7 + $0xc] sm:$0xf]
    %v527 = vld [vmem:[%s7 + $0x10] sm:$0xf]
    %v528 = vld [vmem:[%s7 + $0x14] sm:$0xf]
    %v529 = vld [vmem:[%s7 + $0x18] sm:$0xf]
    %v530 = vld [vmem:[%s7 + $0x1c] sm:$0xf]
    %v531 = vpack.c.bf16 %v520, %v520
    %v532 = vld [vmem:[#allocation10] sm:$0xf]
    %v533 = vld [vmem:[#allocation10 + $0x4] sm:$0xf]
    %v534 = vld [vmem:[#allocation10 + $0x8] sm:$0xf]
    %v535 = vld [vmem:[#allocation10 + $0xc] sm:$0xf]
    %v536 = vld [vmem:[#allocation10 + $0x10] sm:$0xf]
    %v537 = vld [vmem:[#allocation10 + $0x14] sm:$0xf]
    %v538 = vld [vmem:[#allocation10 + $0x18] sm:$0xf]
    %v539 = vld [vmem:[#allocation10 + $0x1c] sm:$0xf]
    %v540 = vld [vmem:[#allocation10 + $0x20] sm:$0xf]
    %v541 = vld [vmem:[#allocation10 + $0x24] sm:$0xf]
    %v542 = vld [vmem:[#allocation10 + $0x28] sm:$0xf]
    %v543 = vld [vmem:[#allocation10 + $0x2c] sm:$0xf]
    %v544 = vld [vmem:[#allocation10 + $0x30] sm:$0xf]
    %v545 = vld [vmem:[#allocation10 + $0x34] sm:$0xf]
    %v546 = vld [vmem:[#allocation10 + $0x38] sm:$0xf]
    %v547 = vld [vmem:[#allocation10 + $0x3c] sm:$0xf]
    %v564 = vunpack.c.l.b16 %v532
    %v565 = vunpack.c.l.b16 %v533
    %v566 = vunpack.c.l.b16 %v534
    %v567 = vunpack.c.l.b16 %v535
    %v568 = vunpack.c.l.b16 %v536
    %v569 = vunpack.c.l.b16 %v537
    %v570 = vunpack.c.l.b16 %v538
    %v571 = vunpack.c.l.b16 %v539
    %v572 = vunpack.c.l.b16 %v540
    %v573 = vunpack.c.l.b16 %v541
    %v574 = vunpack.c.l.b16 %v542
    %v575 = vunpack.c.l.b16 %v543
    %v576 = vunpack.c.l.b16 %v544
    %v577 = vunpack.c.l.b16 %v545
    %v578 = vunpack.c.l.b16 %v546
    %v579 = vunpack.c.l.b16 %v547
    %v580 = vpack.c.b16 %v565, %v564
    %v581 = vpack.c.b16 %v567, %v566
    %v582 = vpack.c.b16 %v569, %v568
    %v583 = vpack.c.b16 %v571, %v570
    %v584 = vpack.c.b16 %v573, %v572
    %v585 = vpack.c.b16 %v575, %v574
    %v586 = vpack.c.b16 %v577, %v576
    %v587 = vpack.c.b16 %v579, %v578
    %596 = vmatprep.subr.bf16.mxu0 0
    %597 = vmatpush1.bf16.msra.mxu0 %v580
    %598 = vmatprep.subr.bf16.mxu0 0
    %599 = vmatpush1.bf16.msra.mxu0 %v581
    %600 = vmatprep.subr.bf16.mxu0 0
    %601 = vmatpush1.bf16.msra.mxu0 %v582
    %602 = vmatprep.subr.bf16.mxu0 0
    %603 = vmatpush1.bf16.msra.mxu0 %v583
    %604 = vmatprep.subr.bf16.mxu0 0
    %605 = vmatpush1.bf16.msra.mxu0 %v584
    %606 = vmatprep.subr.bf16.mxu0 0
    %607 = vmatpush1.bf16.msra.mxu0 %v585
    %608 = vmatprep.subr.bf16.mxu0 0
    %609 = vmatpush1.bf16.msra.mxu0 %v586
    %610 = vmatprep.subr.bf16.mxu0 0
    %611 = vmatpush1.bf16.msra.mxu0 %v587
    %612 = vmatprep.subr.bf16.mxu0 0
    %613 = vmatpush1.bf16.msra.mxu0 0
    %614 = vmatprep.subr.bf16.mxu0 0
    %615 = vmatpush1.bf16.msra.mxu0 0
    %616 = vmatprep.subr.bf16.mxu0 0
    %617 = vmatpush1.bf16.msra.mxu0 0
    %618 = vmatprep.subr.bf16.mxu0 0
    %619 = vmatpush1.bf16.msra.mxu0 0
    %620 = vmatprep.subr.bf16.mxu0 0
    %621 = vmatpush1.bf16.msra.mxu0 0
    %622 = vmatprep.subr.bf16.mxu0 0
    %623 = vmatpush1.bf16.msra.mxu0 0
    %624 = vmatprep.subr.bf16.mxu0 0
    %625 = vmatpush1.bf16.msra.mxu0 0
    %626 = vmatprep.subr.bf16.mxu0 0
    %627 = vmatpush1.bf16.msra.mxu0 0
    %628 = vmatprep.mubr.bf16.mxu0 0
    %629 = vmatmul.mubr.bf16.gmra.mrb[0].mxu0 %v531
    %v630 = vpop.f32.mrb[0].mxu0
    %v631 = vadd.f32 0.0, %v630
    %v632 = vpop.f32.mrb[0].mxu0
    %v633 = vpop.f32.mrb[0].mxu0
    %v634 = vpop.f32.mrb[0].mxu0
    %635 = vdwg.mxu0
    %v644 = vunpack.c.l.b16 %v523
    %v645 = vunpack.c.l.b16 %v524
    %v646 = vunpack.c.l.b16 %v525
    %v647 = vunpack.c.l.b16 %v526
    %v648 = vunpack.c.l.b16 %v527
    %v649 = vunpack.c.l.b16 %v528
    %v650 = vunpack.c.l.b16 %v529
    %v651 = vunpack.c.l.b16 %v530
    %v652 = vpack.c.b16 %v645, %v644
    %v653 = vpack.c.b16 %v647, %v646
    %v654 = vpack.c.b16 %v649, %v648
    %v655 = vpack.c.b16 %v651, %v650
    %vm660 = vcmask 523264
    %v662 = vsel %vm660, %v522, 0
    %664 = vmatprep.subr.bf16.mxu0 0
    %665 = vmatpush1.bf16.msra.mxu0 %v652
    %666 = vmatprep.subr.bf16.mxu0 0
    %667 = vmatpush1.bf16.msra.mxu0 %v653
    %668 = vmatprep.subr.bf16.mxu0 0
    %669 = vmatpush1.bf16.msra.mxu0 %v654
    %670 = vmatprep.subr.bf16.mxu0 0
    %671 = vmatpush1.bf16.msra.mxu0 %v655
    %672 = vmatprep.subr.bf16.mxu0 0
    %673 = vmatpush1.bf16.msra.mxu0 0
    %674 = vmatprep.subr.bf16.mxu0 0
    %675 = vmatpush1.bf16.msra.mxu0 0
    %676 = vmatprep.subr.bf16.mxu0 0
    %677 = vmatpush1.bf16.msra.mxu0 0
    %678 = vmatprep.subr.bf16.mxu0 0
    %679 = vmatpush1.bf16.msra.mxu0 0
    %680 = vmatprep.subr.bf16.mxu0 0
    %681 = vmatpush1.bf16.msra.mxu0 0
    %682 = vmatprep.subr.bf16.mxu0 0
    %683 = vmatpush1.bf16.msra.mxu0 0
    %684 = vmatprep.subr.bf16.mxu0 0
    %685 = vmatpush1.bf16.msra.mxu0 0
    %686 = vmatprep.subr.bf16.mxu0 0
    %687 = vmatpush1.bf16.msra.mxu0 0
    %688 = vmatprep.subr.bf16.mxu0 0
    %689 = vmatpush1.bf16.msra.mxu0 0
    %690 = vmatprep.subr.bf16.mxu0 0
    %691 = vmatpush1.bf16.msra.mxu0 0
    %692 = vmatprep.subr.bf16.mxu0 0
    %693 = vmatpush1.bf16.msra.mxu0 0
    %694 = vmatprep.subr.bf16.mxu0 0
    %695 = vmatpush1.bf16.msra.mxu0 0
    %696 = vmatprep.mubr.bf16.mxu0 0
    %697 = vmatmul.mubr.bf16.gmra.mrb[0].mxu0 %v662
    %v698 = vpop.f32.mrb[0].mxu0
    %v699 = vadd.f32 %v631, %v698
    %v700 = vpop.f32.mrb[0].mxu0
    %v701 = vpop.f32.mrb[0].mxu0
    %v702 = vpop.f32.mrb[0].mxu0
    %703 = vdwg.mxu0
    %v704 = vld [vmem:[%s9] sm:$0x1]
    %v706 = vlaneseq
    %v707 = vshrl.u32 %v706, 7
    %v708 = vsub.s32 0, %v707
    %v709 = vrot.slane %v704, %v708
    %v711 = vadd.f32 %v699, %v709
    %v712 = vtanh.pop %v711
    %v713 = vpack.c.bf16 %v712, %v712
    %v714 = vld [vmem:[#allocation12] sm:$0xf]
    %v715 = vld [vmem:[#allocation12 + $0x4] sm:$0xf]
    %v716 = vld [vmem:[#allocation12 + $0x8] sm:$0xf]
    %v717 = vld [vmem:[#allocation12 + $0xc] sm:$0xf]
    %v718 = vld [vmem:[#allocation12 + $0x10] sm:$0xf]
    %v719 = vld [vmem:[#allocation12 + $0x14] sm:$0xf]
    %v720 = vld [vmem:[#allocation12 + $0x18] sm:$0xf]
    %v721 = vld [vmem:[#allocation12 + $0x1c] sm:$0xf]
    %v722 = vld [vmem:[#allocation12 + $0x20] sm:$0xf]
    %v723 = vld [vmem:[#allocation12 + $0x24] sm:$0xf]
    %v724 = vld [vmem:[#allocation12 + $0x28] sm:$0xf]
    %v725 = vld [vmem:[#allocation12 + $0x2c] sm:$0xf]
    %v726 = vld [vmem:[#allocation12 + $0x30] sm:$0xf]
    %v727 = vld [vmem:[#allocation12 + $0x34] sm:$0xf]
    %v728 = vld [vmem:[#allocation12 + $0x38] sm:$0xf]
    %v729 = vld [vmem:[#allocation12 + $0x3c] sm:$0xf]
    %v730 = vld [vmem:[%s11] sm:$0x1]
    %v732 = vlaneseq
    %v733 = vshrl.u32 %v732, 7
    %v734 = vsub.s32 0, %v733
    %v735 = vrot.slane %v730, %v734
    %v753 = vunpack.c.l.b16 %v714
    %v754 = vunpack.c.l.b16 %v715
    %v755 = vunpack.c.l.b16 %v716
    %v756 = vunpack.c.l.b16 %v717
    %v757 = vunpack.c.l.b16 %v718
    %v758 = vunpack.c.l.b16 %v719
    %v759 = vunpack.c.l.b16 %v720
    %v760 = vunpack.c.l.b16 %v721
    %v761 = vunpack.c.l.b16 %v722
    %v762 = vunpack.c.l.b16 %v723
    %v763 = vunpack.c.l.b16 %v724
    %v764 = vunpack.c.l.b16 %v725
    %v765 = vunpack.c.l.b16 %v726
    %v766 = vunpack.c.l.b16 %v727
    %v767 = vunpack.c.l.b16 %v728
    %v768 = vunpack.c.l.b16 %v729
    %v769 = vpack.c.b16 %v754, %v753
    %v770 = vpack.c.b16 %v756, %v755
    %v771 = vpack.c.b16 %v758, %v757
    %v772 = vpack.c.b16 %v760, %v759
    %v773 = vpack.c.b16 %v762, %v761
    %v774 = vpack.c.b16 %v764, %v763
    %v775 = vpack.c.b16 %v766, %v765
    %v776 = vpack.c.b16 %v768, %v767
    %785 = vmatprep.subr.bf16.mxu0 0
    %786 = vmatpush1.bf16.msra.mxu0 %v769
    %787 = vmatprep.subr.bf16.mxu0 0
    %788 = vmatpush1.bf16.msra.mxu0 %v770
    %789 = vmatprep.subr.bf16.mxu0 0
    %790 = vmatpush1.bf16.msra.mxu0 %v771
    %791 = vmatprep.subr.bf16.mxu0 0
    %792 = vmatpush1.bf16.msra.mxu0 %v772
    %793 = vmatprep.subr.bf16.mxu0 0
    %794 = vmatpush1.bf16.msra.mxu0 %v773
    %795 = vmatprep.subr.bf16.mxu0 0
    %796 = vmatpush1.bf16.msra.mxu0 %v774
    %797 = vmatprep.subr.bf16.mxu0 0
    %798 = vmatpush1.bf16.msra.mxu0 %v775
    %799 = vmatprep.subr.bf16.mxu0 0
    %800 = vmatpush1.bf16.msra.mxu0 %v776
    %801 = vmatprep.subr.bf16.mxu0 0
    %802 = vmatpush1.bf16.msra.mxu0 0
    %803 = vmatprep.subr.bf16.mxu0 0
    %804 = vmatpush1.bf16.msra.mxu0 0
    %805 = vmatprep.subr.bf16.mxu0 0
    %806 = vmatpush1.bf16.msra.mxu0 0
    %807 = vmatprep.subr.bf16.mxu0 0
    %808 = vmatpush1.bf16.msra.mxu0 0
    %809 = vmatprep.subr.bf16.mxu0 0
    %810 = vmatpush1.bf16.msra.mxu0 0
    %811 = vmatprep.subr.bf16.mxu0 0
    %812 = vmatpush1.bf16.msra.mxu0 0
    %813 = vmatprep.subr.bf16.mxu0 0
    %814 = vmatpush1.bf16.msra.mxu0 0
    %815 = vmatprep.subr.bf16.mxu0 0
    %816 = vmatpush1.bf16.msra.mxu0 0
    %817 = vmatprep.mubr.bf16.mxu0 0
    %818 = vmatmul.mubr.bf16.gmra.mrb[0].mxu0 %v713
    %v819 = vpop.f32.mrb[0].mxu0
    %v820 = vadd.f32 %v735, %v819
    %v821 = vpop.f32.mrb[0].mxu0
    %v822 = vpop.f32.mrb[0].mxu0
    %v823 = vpop.f32.mrb[0].mxu0
    %824 = vdwg.mxu0
    %v825 = vtanh.pop %v820
    %v826 = vpack.c.bf16 %v825, %v825
    %v827 = vld [vmem:[#allocation13] sm:$0xf]
    %v828 = vld [vmem:[#allocation13 + $0x4] sm:$0xf]
    %v829 = vld [vmem:[#allocation13 + $0x8] sm:$0xf]
    %v830 = vld [vmem:[#allocation13 + $0xc] sm:$0xf]
    %v831 = vld [vmem:[#allocation13 + $0x10] sm:$0xf]
    %v832 = vld [vmem:[#allocation13 + $0x14] sm:$0xf]
    %v833 = vld [vmem:[#allocation13 + $0x18] sm:$0xf]
    %v834 = vld [vmem:[#allocation13 + $0x1c] sm:$0xf]
    %v835 = vld [vmem:[#allocation13 + $0x20] sm:$0xf]
    %v836 = vld [vmem:[#allocation13 + $0x24] sm:$0xf]
    %v837 = vld [vmem:[#allocation13 + $0x28] sm:$0xf]
    %v838 = vld [vmem:[#allocation13 + $0x2c] sm:$0xf]
    %v839 = vld [vmem:[#allocation13 + $0x30] sm:$0xf]
    %v840 = vld [vmem:[#allocation13 + $0x34] sm:$0xf]
    %v841 = vld [vmem:[#allocation13 + $0x38] sm:$0xf]
    %v842 = vld [vmem:[#allocation13 + $0x3c] sm:$0xf]
    %v843 = vld [vmem:[%s13] sm:$0x1]
    %v845 = vlaneseq
    %v846 = vshrl.u32 %v845, 7
    %v847 = vsub.s32 0, %v846
    %v848 = vrot.slane %v843, %v847
    %v866 = vunpack.c.l.b16 %v827
    %v867 = vunpack.c.l.b16 %v828
    %v868 = vunpack.c.l.b16 %v829
    %v869 = vunpack.c.l.b16 %v830
    %v870 = vunpack.c.l.b16 %v831
    %v871 = vunpack.c.l.b16 %v832
    %v872 = vunpack.c.l.b16 %v833
    %v873 = vunpack.c.l.b16 %v834
    %v874 = vunpack.c.l.b16 %v835
    %v875 = vunpack.c.l.b16 %v836
    %v876 = vunpack.c.l.b16 %v837
    %v877 = vunpack.c.l.b16 %v838
    %v878 = vunpack.c.l.b16 %v839
    %v879 = vunpack.c.l.b16 %v840
    %v880 = vunpack.c.l.b16 %v841
    %v881 = vunpack.c.l.b16 %v842
    %v882 = vpack.c.b16 %v867, %v866
    %v883 = vpack.c.b16 %v869, %v868
    %v884 = vpack.c.b16 %v871, %v870
    %v885 = vpack.c.b16 %v873, %v872
    %v886 = vpack.c.b16 %v875, %v874
    %v887 = vpack.c.b16 %v877, %v876
    %v888 = vpack.c.b16 %v879, %v878
    %v889 = vpack.c.b16 %v881, %v880
    %898 = vmatprep.subr.bf16.mxu0 0
    %899 = vmatpush1.bf16.msra.mxu0 %v882
    %900 = vmatprep.subr.bf16.mxu0 0
    %901 = vmatpush1.bf16.msra.mxu0 %v883
    %902 = vmatprep.subr.bf16.mxu0 0
    %903 = vmatpush1.bf16.msra.mxu0 %v884
    %904 = vmatprep.subr.bf16.mxu0 0
    %905 = vmatpush1.bf16.msra.mxu0 %v885
    %906 = vmatprep.subr.bf16.mxu0 0
    %907 = vmatpush1.bf16.msra.mxu0 %v886
    %908 = vmatprep.subr.bf16.mxu0 0
    %909 = vmatpush1.bf16.msra.mxu0 %v887
    %910 = vmatprep.subr.bf16.mxu0 0
    %911 = vmatpush1.bf16.msra.mxu0 %v888
    %912 = vmatprep.subr.bf16.mxu0 0
    %913 = vmatpush1.bf16.msra.mxu0 %v889
    %914 = vmatprep.subr.bf16.mxu0 0
    %915 = vmatpush1.bf16.msra.mxu0 0
    %916 = vmatprep.subr.bf16.mxu0 0
    %917 = vmatpush1.bf16.msra.mxu0 0
    %918 = vmatprep.subr.bf16.mxu0 0
    %919 = vmatpush1.bf16.msra.mxu0 0
    %920 = vmatprep.subr.bf16.mxu0 0
    %921 = vmatpush1.bf16.msra.mxu0 0
    %922 = vmatprep.subr.bf16.mxu0 0
    %923 = vmatpush1.bf16.msra.mxu0 0
    %924 = vmatprep.subr.bf16.mxu0 0
    %925 = vmatpush1.bf16.msra.mxu0 0
    %926 = vmatprep.subr.bf16.mxu0 0
    %927 = vmatpush1.bf16.msra.mxu0 0
    %928 = vmatprep.subr.bf16.mxu0 0
    %929 = vmatpush1.bf16.msra.mxu0 0
    %930 = vmatprep.mubr.bf16.mxu0 0
    %931 = vmatmul.mubr.bf16.gmra.mrb[0].mxu0 %v826
    %v932 = vpop.f32.mrb[0].mxu0
    %v933 = vadd.f32 %v848, %v932
    %v934 = vpop.f32.mrb[0].mxu0
    %v935 = vpop.f32.mrb[0].mxu0
    %v936 = vpop.f32.mrb[0].mxu0
    %937 = vdwg.mxu0
    %v938 = vtanh.pop %v933
    %v939 = vpack.c.bf16 %v938, %v938
    %v940 = vld [vmem:[#allocation15] sm:$0xf]
    %v941 = vld [vmem:[#allocation15 + $0x4] sm:$0xf]
    %v942 = vld [vmem:[#allocation15 + $0x8] sm:$0xf]
    %v943 = vld [vmem:[#allocation15 + $0xc] sm:$0xf]
    %v944 = vld [vmem:[#allocation15 + $0x10] sm:$0xf]
    %v945 = vld [vmem:[#allocation15 + $0x14] sm:$0xf]
    %v946 = vld [vmem:[#allocation15 + $0x18] sm:$0xf]
    %v947 = vld [vmem:[#allocation15 + $0x1c] sm:$0xf]
    %v948 = vld [vmem:[#allocation15 + $0x20] sm:$0xf]
    %v949 = vld [vmem:[#allocation15 + $0x24] sm:$0xf]
    %v950 = vld [vmem:[#allocation15 + $0x28] sm:$0xf]
    %v951 = vld [vmem:[#allocation15 + $0x2c] sm:$0xf]
    %v952 = vld [vmem:[#allocation15 + $0x30] sm:$0xf]
    %v953 = vld [vmem:[#allocation15 + $0x34] sm:$0xf]
    %v954 = vld [vmem:[#allocation15 + $0x38] sm:$0xf]
    %v955 = vld [vmem:[#allocation15 + $0x3c] sm:$0xf]
    %v956 = vld [vmem:[%s15] sm:$0x1]
    %v958 = vlaneseq
    %v959 = vshrl.u32 %v958, 7
    %v960 = vsub.s32 0, %v959
    %v961 = vrot.slane %v956, %v960
    %v979 = vunpack.c.l.b16 %v940
    %v980 = vunpack.c.l.b16 %v941
    %v981 = vunpack.c.l.b16 %v942
    %v982 = vunpack.c.l.b16 %v943
    %v983 = vunpack.c.l.b16 %v944
    %v984 = vunpack.c.l.b16 %v945
    %v985 = vunpack.c.l.b16 %v946
    %v986 = vunpack.c.l.b16 %v947
    %v987 = vunpack.c.l.b16 %v948
    %v988 = vunpack.c.l.b16 %v949
    %v989 = vunpack.c.l.b16 %v950
    %v990 = vunpack.c.l.b16 %v951
    %v991 = vunpack.c.l.b16 %v952
    %v992 = vunpack.c.l.b16 %v953
    %v993 = vunpack.c.l.b16 %v954
    %v994 = vunpack.c.l.b16 %v955
    %v995 = vpack.c.b16 %v980, %v979
    %v996 = vpack.c.b16 %v982, %v981
    %v997 = vpack.c.b16 %v984, %v983
    %v998 = vpack.c.b16 %v986, %v985
    %v999 = vpack.c.b16 %v988, %v987
    %v1000 = vpack.c.b16 %v990, %v989
    %v1001 = vpack.c.b16 %v992, %v991
    %v1002 = vpack.c.b16 %v994, %v993
    %1011 = vmatprep.subr.bf16.mxu0 0
    %1012 = vmatpush1.bf16.msra.mxu0 %v995
    %1013 = vmatprep.subr.bf16.mxu0 0
    %1014 = vmatpush1.bf16.msra.mxu0 %v996
    %1015 = vmatprep.subr.bf16.mxu0 0
    %1016 = vmatpush1.bf16.msra.mxu0 %v997
    %1017 = vmatprep.subr.bf16.mxu0 0
    %1018 = vmatpush1.bf16.msra.mxu0 %v998
    %1019 = vmatprep.subr.bf16.mxu0 0
    %1020 = vmatpush1.bf16.msra.mxu0 %v999
    %1021 = vmatprep.subr.bf16.mxu0 0
    %1022 = vmatpush1.bf16.msra.mxu0 %v1000
    %1023 = vmatprep.subr.bf16.mxu0 0
    %1024 = vmatpush1.bf16.msra.mxu0 %v1001
    %1025 = vmatprep.subr.bf16.mxu0 0
    %1026 = vmatpush1.bf16.msra.mxu0 %v1002
    %1027 = vmatprep.subr.bf16.mxu0 0
    %1028 = vmatpush1.bf16.msra.mxu0 0
    %1029 = vmatprep.subr.bf16.mxu0 0
    %1030 = vmatpush1.bf16.msra.mxu0 0
    %1031 = vmatprep.subr.bf16.mxu0 0
    %1032 = vmatpush1.bf16.msra.mxu0 0
    %1033 = vmatprep.subr.bf16.mxu0 0
    %1034 = vmatpush1.bf16.msra.mxu0 0
    %1035 = vmatprep.subr.bf16.mxu0 0
    %1036 = vmatpush1.bf16.msra.mxu0 0
    %1037 = vmatprep.subr.bf16.mxu0 0
    %1038 = vmatpush1.bf16.msra.mxu0 0
    %1039 = vmatprep.subr.bf16.mxu0 0
    %1040 = vmatpush1.bf16.msra.mxu0 0
    %1041 = vmatprep.subr.bf16.mxu0 0
    %1042 = vmatpush1.bf16.msra.mxu0 0
    %1043 = vmatprep.mubr.bf16.mxu0 0
    %1044 = vmatmul.mubr.bf16.gmra.mrb[0].mxu0 %v939
    %v1045 = vpop.f32.mrb[0].mxu0
    %v1046 = vadd.f32 %v961, %v1045
    %v1047 = vpop.f32.mrb[0].mxu0
    %v1048 = vpop.f32.mrb[0].mxu0
    %v1049 = vpop.f32.mrb[0].mxu0
    %1050 = vdwg.mxu0
    %1051 = vst [vmem:[#allocation16] sm:$0xff] %v1046
    // Predicated region
    $region90: #{tpu_custom_call.1} parent=1 // pred_check
      _
    $region91: #{tpu_custom_call.1} parent=1 // pred_check_branch
      %1053 = sbr.rel (0) target = $region93
    $region92: #{tpu_custom_call.1} parent=1 // pred_region
      %s1055 = ssub.s32 128, 128
      %1056 = vsyncadd [#allocation6], %s1055
      %s1058 = sshll.u32 [#allocation16], 4
      %s1059 = int_to_ptr.vmem [resolvable:$true] %s1058
      %1061 = dma.vmem_to_hbm [thread:$0]  %s1059, 128, %s16, [#allocation6]
    $region93: #{tpu_custom_call.1} parent=1 // pred_fallthru
      _
    // Predicated region
    $region94: #{tpu_custom_call.1} parent=1 // pred_check
      _
    $region95: #{tpu_custom_call.1} parent=1 // pred_check_branch
      %1063 = sbr.rel (0) target = $region97
    $region96: #{tpu_custom_call.1} parent=1 // pred_region
      %1064 = dma.done [#allocation6], 128
    $region97: #{tpu_custom_call.1} parent=1 // pred_fallthru
      _
    %1065 = vsyncpa [#allocation5], 1
    %1066 = vsyncpa [#allocation8], 1
    %1067 = vsyncpa [#allocation11], 1
    %1068 = vsyncpa [#allocation14], 1
    %1069 = vsyncpa [#allocation6], 1

</llo_original>
